<compile_context>
chip_gen: v7x
topology: tpu7x:2x2x1
jax: 0.10.0
libtpu: 0.0.40
codegen_flags: <defaults>
</compile_context>

<pallas_src>
import jax
import jax.numpy as jnp
from jax.experimental import pallas as pl
from jax.experimental.pallas import tpu as pltpu


def stickiness_kernel(choices_ref, expand_ref, beta_ref, out_ref):
    """choices_ref: (tn, T)   int32   VMEM
       expand_ref : (T, L)    float32 VMEM, L = T * num_options
       beta_ref   : (1,)      float32 SMEM
       out_ref    : (tn, L)   float32 VMEM  (lane-dense, row-major (T, A) flat)"""
    T = choices_ref.shape[-1]
    L = out_ref.shape[-1]
    A = L // T

    # c_prev[n, l] = choices[n, l // A - 1] for l >= A (and 0 for l < A),
    # produced by a single small MXU matmul with the constant expansion matrix.
    cf = choices_ref[...].astype(jnp.float32)                            # (tn, T)
    c_prev = jnp.dot(cf, expand_ref[...],
                     preferred_element_type=jnp.float32)                 # (tn, L)

    # Per-lane constants (built once as (1, L); broadcast over sublanes).
    lane = jax.lax.broadcasted_iota(jnp.int32, (1, L), 1)                # (1, L)
    a_of_l = (lane % A).astype(jnp.float32)                              # option index
    valid = lane >= A                                                    # t >= 1

    # Values are small exact integers, so the f32 equality compare is exact.
    hit = jnp.logical_and(c_prev == a_of_l, valid)                       # (tn, L)
    out_ref[...] = jnp.where(hit, beta_ref[0], jnp.float32(0.0))


def stickiness(choices, beta, num_options, *, block_n=256):
    """choices: (N, T) integer; beta: scalar -> (N, T, num_options) float32."""
    N, T = choices.shape
    A = int(num_options)
    L = T * A

    choices = choices.astype(jnp.int32)
    beta_arr = jnp.asarray(beta, jnp.float32).reshape((1,))

    # Constant expansion matrix: expand[t, l] = 1.0 iff l // A == t + 1, so that
    # (choices @ expand)[n, l] == choices[n, l // A - 1] for l >= A (else 0).
    t_idx = jnp.arange(T, dtype=jnp.int32)[:, None]
    l_idx = jnp.arange(L, dtype=jnp.int32)[None, :]
    expand = (l_idx // A == t_idx + 1).astype(jnp.float32)               # (T, L)

    # Tile over N.  tn == N (full dim) when small, else a multiple of 8;
    # output tile stays ~<=1 MiB so double-buffered tiles fit v5e/v7x VMEM.
    tn = min(N, block_n)
    grid = (pl.cdiv(N, tn),)

    flops = 2 * N * T * L + 4 * N * L
    bytes_accessed = 4 * (N * T + T * L + N * L + 1)

    out_flat = pl.pallas_call(
        stickiness_kernel,
        out_shape=jax.ShapeDtypeStruct((N, L), jnp.float32),
        grid=grid,
        in_specs=[
            pl.BlockSpec((tn, T), lambda i: (i, 0)),
            pl.BlockSpec((T, L), lambda i: (0, 0)),      # resident, fetched once
            pl.BlockSpec(memory_space=pltpu.MemorySpace.SMEM),
        ],
        out_specs=pl.BlockSpec((tn, L), lambda i: (i, 0)),
        compiler_params=pltpu.CompilerParams(
            dimension_semantics=("parallel",)),
        cost_estimate=pl.CostEstimate(
            flops=flops, transcendentals=0, bytes_accessed=bytes_accessed),
    )(choices, expand, beta_arr)

    # Free metadata reshape back to the PyTorch (N, T, A) convention.
    return out_flat.reshape(N, T, A)


def stickiness_ref(choices, beta, num_options):
    """Pure-JAX reference mirroring the PyTorch forward."""
    N, T = choices.shape
    prev0 = jnp.zeros((N, 1, num_options), jnp.float32)
    prev1 = jnp.stack(
        [(choices[:, :-1] == a).astype(jnp.float32) for a in range(num_options)],
        axis=-1,
    )
    prev = jnp.concatenate([prev0, prev1], axis=1)
    return prev * beta


if __name__ == "__main__":
    key = jax.random.PRNGKey(0)
    k_beta, k_choices = jax.random.split(key)

    N, T, NUM_OPTIONS = 8, 32, 4   # L = T*A = 128 -> fully lane-dense output rows

    # Deterministic parameter init (matches nn.Parameter(0.01 * torch.randn([]))).
    beta = 0.01 * jax.random.normal(k_beta, (), dtype=jnp.float32)

    # Deterministic integer choices in [0, num_options).
    choices = jax.random.randint(k_choices, (N, T), 0, NUM_OPTIONS, dtype=jnp.int32)

    out = stickiness(choices, beta, NUM_OPTIONS)
    out = jax.block_until_ready(out)

    ref = stickiness_ref(choices, beta, NUM_OPTIONS)
    assert out.shape == (N, T, NUM_OPTIONS)
    assert jnp.allclose(out, ref, atol=1e-6), "mismatch vs. reference"

    print("KERNEL_OK")
</pallas_src>

<mosaic_0001>
module attributes {stable_mosaic.version = 11 : i64} {
  func.func @stickiness_kernel(%arg0: i32, %arg1: memref<8x32xi32, #tpu.memory_space<vmem>>, %arg2: memref<32x128xf32, #tpu.memory_space<vmem>>, %arg3: memref<1xf32, #tpu.memory_space<smem>>, %arg4: memref<8x128xf32, #tpu.memory_space<vmem>>) attributes {dimension_semantics = [#tpu.dimension_semantics<parallel>], iteration_bounds = array<i64: 1>, scalar_prefetch = 0 : i64, scratch_operands = 0 : i64, tpu.core_type = #tpu.core_type<tc>, window_params = [{transform_indices = @transform_0, window_bounds = array<i64: 8, 32>}, {pipeline_mode = #tpu.pipeline_mode<synchronous>, transform_indices = @transform_1, window_bounds = array<i64: 32, 128>}, {transform_indices = @transform_2, window_bounds = array<i64: 1>}, {transform_indices = @transform_3, window_bounds = array<i64: 8, 128>}]} {
    %c0 = arith.constant 0 : index
    %c0_0 = arith.constant 0 : index
    %0 = vector.load %arg1[%c0, %c0_0] : memref<8x32xi32, #tpu.memory_space<vmem>>, vector<8x32xi32>
    %1 = arith.sitofp %0 : vector<8x32xi32> to vector<8x32xf32>
    %c0_1 = arith.constant 0 : index
    %c0_2 = arith.constant 0 : index
    %2 = vector.load %arg2[%c0_1, %c0_2] : memref<32x128xf32, #tpu.memory_space<vmem>>, vector<32x128xf32>
    %cst = arith.constant dense<0.000000e+00> : vector<8x128xf32>
    %3 = tpu.matmul %1, %2, %cst {dimension_numbers = #tpu.dot_dimension_numbers<[1], [0], [0], [1], [0, 0, 1, 1], [], []>} : vector<8x32xf32>, vector<32x128xf32>, vector<8x128xf32> -> vector<8x128xf32>
    %4 = tpu.iota {dimensions = array<i32: 1>} : vector<1x128xi32>
    %c4_i32 = arith.constant 4 : i32
    %c0_i32 = arith.constant 0 : i32
    %5 = arith.cmpi eq, %c4_i32, %c0_i32 : i32
    %c1_i32 = arith.constant 1 : i32
    %6 = arith.select %5, %c1_i32, %c4_i32 : i32
    %7 = vector.broadcast %6 : i32 to vector<1x128xi32>
    %8 = arith.remsi %4, %7 : vector<1x128xi32>
    %c0_i32_3 = arith.constant 0 : i32
    %9 = vector.broadcast %c0_i32_3 : i32 to vector<1x128xi32>
    %10 = arith.cmpi ne, %8, %9 : vector<1x128xi32>
    %c0_i32_4 = arith.constant 0 : i32
    %11 = vector.broadcast %c0_i32_4 : i32 to vector<1x128xi32>
    %12 = arith.cmpi slt, %8, %11 : vector<1x128xi32>
    %c0_i32_5 = arith.constant 0 : i32
    %13 = arith.cmpi slt, %6, %c0_i32_5 : i32
    %14 = vector.broadcast %13 : i1 to vector<1x128xi1>
    %15 = vector.broadcast %14 : vector<1x128xi1> to vector<1x128xi1>
    %16 = arith.xori %12, %15 : vector<1x128xi1>
    %17 = arith.andi %16, %10 : vector<1x128xi1>
    %18 = vector.broadcast %6 : i32 to vector<1x128xi32>
    %19 = arith.addi %8, %18 : vector<1x128xi32>
    %20 = arith.select %17, %19, %8 : vector<1x128xi1>, vector<1x128xi32>
    %21 = arith.sitofp %20 : vector<1x128xi32> to vector<1x128xf32>
    %c4_i32_6 = arith.constant 4 : i32
    %22 = vector.broadcast %c4_i32_6 : i32 to vector<1x128xi32>
    %23 = arith.cmpi sge, %4, %22 : vector<1x128xi32>
    %24 = vector.broadcast %21 : vector<1x128xf32> to vector<8x128xf32>
    %25 = arith.cmpf oeq, %3, %24 : vector<8x128xf32>
    %26 = vector.broadcast %23 : vector<1x128xi1> to vector<8x128xi1>
    %27 = arith.andi %25, %26 : vector<8x128xi1>
    %c0_7 = arith.constant 0 : index
    %28 = memref.load %arg3[%c0_7] : memref<1xf32, #tpu.memory_space<smem>>
    %cst_8 = arith.constant 0.000000e+00 : f32
    %29 = vector.broadcast %28 : f32 to vector<8x128xf32>
    %30 = vector.broadcast %cst_8 : f32 to vector<8x128xf32>
    %31 = arith.select %27, %29, %30 : vector<8x128xi1>, vector<8x128xf32>
    %c0_9 = arith.constant 0 : index
    %c0_10 = arith.constant 0 : index
    %32 = vector.load %arg4[%c0_9, %c0_10] : memref<8x128xf32, #tpu.memory_space<vmem>>, vector<8x128xf32>
    tpu.vector_store %arg4[%c0_9, %c0_10], %31 {strides = array<i32>} : memref<8x128xf32, #tpu.memory_space<vmem>>, vector<8x128xf32>,
    return
  }
  func.func @transform_0(%arg0: i32) -> (i32, i32) {
    %c0_i32 = arith.constant 0 : i32
    %c0_i32_0 = arith.constant 0 : i32
    return %arg0, %c0_i32 : i32, i32
  }
  func.func @transform_1(%arg0: i32) -> (i32, i32) {
    %c0_i32 = arith.constant 0 : i32
    %c0_i32_0 = arith.constant 0 : i32
    %c0_i32_1 = arith.constant 0 : i32
    return %c0_i32, %c0_i32_0 : i32, i32
  }
  func.func @transform_2(%arg0: i32) -> i32 {
    %c0_i32 = arith.constant 0 : i32
    %c0_i32_0 = arith.constant 0 : i32
    return %c0_i32 : i32
  }
  func.func @transform_3(%arg0: i32) -> (i32, i32) {
    %c0_i32 = arith.constant 0 : i32
    %c0_i32_0 = arith.constant 0 : i32
    return %arg0, %c0_i32 : i32, i32
  }
}

</mosaic_0001>

<llo_original>
// kernel: tpu_custom_call.1
$region0: #{tpu_custom_call.1}
  #allocation0 [shape = 'u32[]', space=smem, size = 0x4, offset = 0x4, fixed_abs, tag = 'smem constant byte address 0x4 - core index']
  #allocation1 [shape = 'u32[144,128]{1,0:T(1,128)}', space=vmem, size = 0x12000, scoped, tag = 'internal scratch']
  #allocation2 [shape = 'f32[1]{0:T(128)S(6)}', space=smem, size = 0x200, scoped, tag = 'scoped memory for tpu_custom_call.1']
  %s0 = inlined_call_operand.hbm [shape: s32[8,32], index: 0, kind: input, shape index: {}]
  %s1 = inlined_call_operand.hbm [shape: f32[32,128], index: 1, kind: input, shape index: {}]
  %s2 = inlined_call_operand.<no memory space> [shape: f32[1], index: 2, kind: input, shape index: {}]
  %s3 = inlined_call_operand.hbm [shape: f32[8,128], index: 3, kind: output, shape index: {}]
  %s4 = sld [smem:[#allocation0]]
  $region30: #{tpu_custom_call.1} parent=0
    _
  %s6 = ssub.s32 1, %s4
  %s7 = scalar_select 0, %s6, %s4
  %8 = sst [smem:[#allocation2]] %s2
  $region1: #{tpu_custom_call.1} parent=0
    #allocation3 [shape = 'u8[4096]{0}', space=vmem, size = 0x1000, scoped, tag = 'input window, operand 0, single buffered']
    #allocation4 [shape = 's32[1]{0}', space=sflag, size = 0x4, scoped, tag = 'scoped memory for tpu_custom_call.1']
    #allocation5 [shape = 's32[1]{0}', space=sflag, size = 0x4, scoped, tag = 'scoped memory for tpu_custom_call.1']
    #allocation6 [shape = 'u8[16384]{0}', space=vmem, size = 0x4000, scoped, tag = 'input window, operand 1, single buffered']
    #allocation7 [shape = 's32[1]{0}', space=sflag, size = 0x4, scoped, tag = 'scoped memory for tpu_custom_call.1']
    #allocation8 [shape = 'u8[4096]{0}', space=vmem, size = 0x1000, scoped, tag = 'output window, operand 0, single buffered']
    %9 = vsyncpa [#allocation4], 0
    %10 = vsyncpa [#allocation7], 0
    %11 = vsyncpa [#allocation5], 0
    // Predicated region
    $region2: #{tpu_custom_call.1} parent=1 // pred_check
      _
    $region3: #{tpu_custom_call.1} parent=1 // pred_check_branch
      %13 = sbr.rel (0) target = $region5
    $region4: #{tpu_custom_call.1} parent=1 // pred_region
      %s15 = ssub.s32 128, 128
      %16 = vsyncadd [#allocation4], %s15
      %s18 = sshll.u32 [#allocation3], 4
      %s19 = int_to_ptr.vmem [resolvable:$true] %s18
      %21 = dma.hbm_to_vmem [thread:$0]  %s0, 128, %s19, [#allocation4]
    $region5: #{tpu_custom_call.1} parent=1 // pred_fallthru
      _
    // Predicated region
    $region6: #{tpu_custom_call.1} parent=1 // pred_check
      _
    $region7: #{tpu_custom_call.1} parent=1 // pred_check_branch
      %23 = sbr.rel (0) target = $region9
    $region8: #{tpu_custom_call.1} parent=1 // pred_region
      %s25 = ssub.s32 512, 512
      %26 = vsyncadd [#allocation7], %s25
      %s27 = sshll.u32 [#allocation6], 4
      %s28 = int_to_ptr.vmem [resolvable:$true] %s27
      %33 = dma.hbm_to_vmem [thread:$0]  %s1, 512, %s28, [#allocation7], 128, 128, 8
    $region9: #{tpu_custom_call.1} parent=1 // pred_fallthru
      _
    // Predicated region
    $region10: #{tpu_custom_call.1} parent=1 // pred_check
      _
    $region11: #{tpu_custom_call.1} parent=1 // pred_check_branch
      %35 = sbr.rel (0) target = $region13
    $region12: #{tpu_custom_call.1} parent=1 // pred_region
      _
    $region13: #{tpu_custom_call.1} parent=1 // pred_fallthru
      _
    // Predicated region
    $region14: #{tpu_custom_call.1} parent=1 // pred_check
      _
    $region15: #{tpu_custom_call.1} parent=1 // pred_check_branch
      %37 = sbr.rel (0) target = $region17
    $region16: #{tpu_custom_call.1} parent=1 // pred_region
      %38 = dma.done [#allocation4], 128
    $region17: #{tpu_custom_call.1} parent=1 // pred_fallthru
      _
    // Predicated region
    $region18: #{tpu_custom_call.1} parent=1 // pred_check
      _
    $region19: #{tpu_custom_call.1} parent=1 // pred_check_branch
      %40 = sbr.rel (0) target = $region21
    $region20: #{tpu_custom_call.1} parent=1 // pred_region
      %41 = dma.done [#allocation7], 512
    $region21: #{tpu_custom_call.1} parent=1 // pred_fallthru
      _
    %v42 = vld [vmem:[#allocation3] sm:$0xff]
    %v43 = vcvt.s32.f32 %v42
    %v44 = vld [vmem:[#allocation6] sm:$0xff]
    %v45 = vld [vmem:[#allocation6 + $0x8] sm:$0xff]
    %v46 = vld [vmem:[#allocation6 + $0x10] sm:$0xff]
    %v47 = vld [vmem:[#allocation6 + $0x18] sm:$0xff]
    %vm48 = vcmask 261120
    %v50 = vsel %vm48, %v43, 0
    %52 = vmatprep.subr.mxu0 0.0
    %53 = vmatpush1.msra.mxu0 %v44
    %54 = vmatprep.subr.mxu0 0.0
    %55 = vmatpush1.msra.mxu0 %v45
    %56 = vmatprep.subr.mxu0 0.0
    %57 = vmatpush1.msra.mxu0 %v46
    %58 = vmatprep.subr.mxu0 0.0
    %59 = vmatpush1.msra.mxu0 %v47
    %60 = vmatprep.subr.mxu0 0.0
    %61 = vmatpush1.msra.mxu0 0.0
    %62 = vmatprep.subr.mxu0 0.0
    %63 = vmatpush1.msra.mxu0 0.0
    %64 = vmatprep.subr.mxu0 0.0
    %65 = vmatpush1.msra.mxu0 0.0
    %66 = vmatprep.subr.mxu0 0.0
    %67 = vmatpush1.msra.mxu0 0.0
    %68 = vmatprep.subr.mxu0 0.0
    %69 = vmatpush1.msra.mxu0 0.0
    %70 = vmatprep.subr.mxu0 0.0
    %71 = vmatpush1.msra.mxu0 0.0
    %72 = vmatprep.subr.mxu0 0.0
    %73 = vmatpush1.msra.mxu0 0.0
    %74 = vmatprep.subr.mxu0 0.0
    %75 = vmatpush1.msra.mxu0 0.0
    %76 = vmatprep.subr.mxu0 0.0
    %77 = vmatpush1.msra.mxu0 0.0
    %78 = vmatprep.subr.mxu0 0.0
    %79 = vmatpush1.msra.mxu0 0.0
    %80 = vmatprep.subr.mxu0 0.0
    %81 = vmatpush1.msra.mxu0 0.0
    %82 = vmatprep.subr.mxu0 0.0
    %83 = vmatpush1.msra.mxu0 0.0
    %84 = vmatprep.subr.mxu0 0.0
    %85 = vmatpush1.msra.mxu0 0.0
    %86 = vmatprep.subr.mxu0 0.0
    %87 = vmatpush1.msra.mxu0 0.0
    %88 = vmatprep.subr.mxu0 0.0
    %89 = vmatpush1.msra.mxu0 0.0
    %90 = vmatprep.subr.mxu0 0.0
    %91 = vmatpush1.msra.mxu0 0.0
    %92 = vmatprep.subr.mxu0 0.0
    %93 = vmatpush1.msra.mxu0 0.0
    %94 = vmatprep.subr.mxu0 0.0
    %95 = vmatpush1.msra.mxu0 0.0
    %96 = vmatprep.subr.mxu0 0.0
    %97 = vmatpush1.msra.mxu0 0.0
    %98 = vmatprep.subr.mxu0 0.0
    %99 = vmatpush1.msra.mxu0 0.0
    %100 = vmatprep.subr.mxu0 0.0
    %101 = vmatpush1.msra.mxu0 0.0
    %102 = vmatprep.subr.mxu0 0.0
    %103 = vmatpush1.msra.mxu0 0.0
    %104 = vmatprep.subr.mxu0 0.0
    %105 = vmatpush1.msra.mxu0 0.0
    %106 = vmatprep.subr.mxu0 0.0
    %107 = vmatpush1.msra.mxu0 0.0
    %108 = vmatprep.subr.mxu0 0.0
    %109 = vmatpush1.msra.mxu0 0.0
    %110 = vmatprep.subr.mxu0 0.0
    %111 = vmatpush1.msra.mxu0 0.0
    %112 = vmatprep.subr.mxu0 0.0
    %113 = vmatpush1.msra.mxu0 0.0
    %114 = vmatprep.subr.mxu0 0.0
    %115 = vmatpush1.msra.mxu0 0.0
    %116 = vmatprep.mubr.f32.mxu0 0.0
    %117 = vmatmul.mubr.f32.gmra.mrb[0].mxu0 %v50
    %v118 = vpop.f32.mrb[0].mxu0
    %v119 = vadd.f32 0.0, %v118
    %v120 = vpop.f32.mrb[0].mxu0
    %121 = vdwg.mxu0
    %v122 = vlaneseq
    %v123 = vand.u32 %v122, 127
    %vm124 = vcmp.lt.s32.totalorder %v123, 0
    %v125 = vsub.s32 0, %v123
    %v126 = vsel %vm124, %v125, %v123
    %v127 = vshrl.u32 %v126, 2
    %v128 = vand.u32 %v126, 3
    %v129 = vsub.s32 0, %v128
    %v130 = vsel %vm124, %v129, %v128
    %vm131 = vcmp.ne.s32.totalorder %v130, 0
    %vm132 = vcmp.lt.s32.totalorder %v130, 0
    %vm133 = vmand %vm132, %vm131
    %v134 = vadd.s32 %v130, 4
    %v135 = vsel %vm133, %v134, %v130
    %v136 = vcvt.s32.f32 %v135
    %vm137 = vcmp.ge.s32.totalorder %v123, 4
    %vm138 = vcmp.eq.f32.partialorder %v119, %v136
    %v139 = vsel %vm137, 1, 0
    %vm140 = vcmp.eq.s32.totalorder %v139, 1
    %vm141 = vmand %vm138, %vm140
    %s142 = sld [smem:[#allocation2]]
    %v143 = vstv %s142
    %v144 = vsel %vm141, %v143, 0.0
    %145 = vst [vmem:[#allocation8] sm:$0xff] %v144
    // Predicated region
    $region22: #{tpu_custom_call.1} parent=1 // pred_check
      _
    $region23: #{tpu_custom_call.1} parent=1 // pred_check_branch
      %147 = sbr.rel (0) target = $region25
    $region24: #{tpu_custom_call.1} parent=1 // pred_region
      %s149 = ssub.s32 128, 128
      %150 = vsyncadd [#allocation5], %s149
      %s152 = sshll.u32 [#allocation8], 4
      %s153 = int_to_ptr.vmem [resolvable:$true] %s152
      %155 = dma.vmem_to_hbm [thread:$0]  %s153, 128, %s3, [#allocation5]
    $region25: #{tpu_custom_call.1} parent=1 // pred_fallthru
      _
    // Predicated region
    $region26: #{tpu_custom_call.1} parent=1 // pred_check
      _
    $region27: #{tpu_custom_call.1} parent=1 // pred_check_branch
      %157 = sbr.rel (0) target = $region29
    $region28: #{tpu_custom_call.1} parent=1 // pred_region
      %158 = dma.done [#allocation5], 128
    $region29: #{tpu_custom_call.1} parent=1 // pred_fallthru
      _
    %159 = vsyncpa [#allocation4], 1
    %160 = vsyncpa [#allocation7], 1
    %161 = vsyncpa [#allocation5], 1

</llo_original>
